<compile_context>
chip_gen: v5e
topology: v5e:2x2
jax: 0.10.0
libtpu: 0.0.40
codegen_flags: <defaults>
</compile_context>

<pallas_src>
import functools

import jax
import jax.numpy as jnp
from jax.experimental import pallas as pl
from jax.experimental.pallas import tpu as pltpu


def _round_up(x, m):
    return ((x + m - 1) // m) * m


def _focal_label_loss_kernel(pred_ref, tgt_ref, loss_ref, *, alpha, gamma):
    """One lane-dense row-tile of multi-class focal label loss.

    pred_ref : (Cp, TR) logits  -- classes on sublanes, rows on lanes
    tgt_ref  : (1,  TR) int32 class indices
    loss_ref : (1,  TR) float32 per-row loss (pre-reduction)
    """
    logits = pred_ref[...].astype(jnp.float32)               # (Cp, TR)
    tgt = tgt_ref[...]                                        # (1, TR)

    # Numerically-stable softmax over the class (sublane) axis.
    m = jnp.max(logits, axis=0, keepdims=True)                # (1, TR)
    e = jnp.exp(logits - m)                                   # (Cp, TR)
    denom = jnp.sum(e, axis=0, keepdims=True)                 # (1, TR)
    p = e * pl.reciprocal(denom, approx=False)                # (Cp, TR)

    # Genuine-class selection (== one_hot_idx gather in the torch code).
    class_ids = jax.lax.broadcasted_iota(jnp.int32, logits.shape, 0)
    genuine = class_ids == tgt                                # (Cp, TR)

    # pt = p on the genuine class, (1 - p) elsewhere.
    pt = jnp.where(genuine, p, 1.0 - p)
    one_minus_pt = 1.0 - pt

    # Focal weight: gamma is static.  Integer fast-paths avoid jnp.power,
    # which would add exp+log EUP pushes per element.
    if float(gamma) == 2.0:
        focal_w = one_minus_pt * one_minus_pt
    elif float(gamma) == 1.0:
        focal_w = one_minus_pt
    else:
        focal_w = jnp.power(one_minus_pt, jnp.float32(gamma))

    per_class = (-alpha) * focal_w * jnp.log(pt)              # (Cp, TR)
    # Padded class sublanes have p == 0 -> pt == 1 -> contribution exactly 0.
    loss_ref[...] = jnp.sum(per_class, axis=0, keepdims=True)


def focal_label_loss(predictions, targets, *, focal_alpha=0.1, focal_gamma=2.0,
                     reduction="mean", row_tile=4096):
    """LabelLoss(method="focal") forward, multi-class branch.

    predictions : (..., C) float logits (native dtype kept; cast in-kernel)
    targets     : (...,)   int class indices with the same leading dims
    """
    n_labels = predictions.shape[-1]
    lead_shape = predictions.shape[:-1]

    pred2d = predictions.reshape(-1, n_labels)                # native dtype
    rows = pred2d.shape[0]
    tgt1d = targets.reshape(-1).astype(jnp.int32)

    # Tile selection: multiples of 128 lanes, as large as row_tile allows,
    # but aim for >= 2 grid steps when there is enough work (v7x shards the
    # "parallel" grid axis across its 2 TensorCores).  Tiles stay far below
    # the per-generation scoped-VMEM limits (16/32/32 MiB on v5e/v6e/v7x).
    tile = max(128, min(_round_up(int(row_tile), 128), _round_up(rows, 128)))
    if rows > 128 and _round_up(rows, tile) // tile < 2:
        tile = max(128, _round_up(pl.cdiv(_round_up(rows, 128), 2), 128))
    rows_pad = _round_up(rows, tile)
    grid = rows_pad // tile

    c_pad = _round_up(max(n_labels, 8), 8)

    # Lane-dense slab: transpose to (C, R); pad classes/rows.  Padded class
    # logits use the dtype's most-negative value so softmax gives them p == 0
    # (their focal term is exactly 0); padded rows are sliced off below.
    pred_t = jnp.transpose(pred2d)                            # (C, R)
    pad_val = jnp.finfo(pred_t.dtype).min
    pred_t = jnp.pad(pred_t,
                     ((0, c_pad - n_labels), (0, rows_pad - rows)),
                     constant_values=pad_val)
    tgt2d = jnp.pad(tgt1d, (0, rows_pad - rows)).reshape(1, rows_pad)

    kernel = functools.partial(_focal_label_loss_kernel,
                               alpha=float(focal_alpha),
                               gamma=float(focal_gamma))

    per_row = pl.pallas_call(
        kernel,
        out_shape=jax.ShapeDtypeStruct((1, rows_pad), jnp.float32),
        grid_spec=pltpu.PrefetchScalarGridSpec(
            num_scalar_prefetch=0,
            grid=(grid,),
            in_specs=[
                pl.BlockSpec((c_pad, tile), lambda i: (0, i)),
                pl.BlockSpec((1, tile), lambda i: (0, i)),
            ],
            out_specs=pl.BlockSpec((1, tile), lambda i: (0, i)),
        ),
        compiler_params=pltpu.CompilerParams(
            dimension_semantics=("parallel",)),
    )(pred_t, tgt2d)

    loss = per_row[0, :rows].reshape(lead_shape)
    if reduction == "mean":
        return jnp.mean(loss)
    elif reduction == "sum":
        return jnp.sum(loss)
    return loss


def _focal_label_loss_ref(predictions, targets, *, focal_alpha=0.1,
                          focal_gamma=2.0):
    """Pure-JAX reference mirroring LabelLoss._focal_loss (method='focal')."""
    p = jax.nn.softmax(predictions.astype(jnp.float32), axis=-1)
    onehot = jax.nn.one_hot(targets, predictions.shape[-1], dtype=jnp.float32)
    pt = onehot * p + (1.0 - onehot) * (1.0 - p)
    loss = (-focal_alpha * jnp.power(1.0 - pt, focal_gamma) * jnp.log(pt)).sum(-1)
    return loss.mean()


if __name__ == "__main__":
    # Detection-style shapes: batch=2, anchors=64, n_labels=8.
    B, N, C = 2, 64, 8
    key = jax.random.PRNGKey(0)
    k_pred, k_tgt = jax.random.split(key)

    predictions = jax.random.normal(k_pred, (B, N, C), dtype=jnp.float32)
    targets = jax.random.randint(k_tgt, (B, N), 0, C, dtype=jnp.int32)

    out = focal_label_loss(predictions, targets,
                           focal_alpha=0.1, focal_gamma=2.0, reduction="mean")
    out = jax.block_until_ready(out)
    ref = _focal_label_loss_ref(predictions, targets,
                                focal_alpha=0.1, focal_gamma=2.0)
    assert jnp.allclose(out, ref, rtol=1e-5, atol=1e-5), (out, ref)

    # Second check: row count not a multiple of 128 and n_labels < 8 to
    # exercise the row/class padding + multi-tile (grid >= 2) path.
    B2, N2, C2 = 3, 50, 5
    k1, k2 = jax.random.split(jax.random.PRNGKey(1))
    pred2 = jax.random.normal(k1, (B2, N2, C2), dtype=jnp.float32)
    tgt2 = jax.random.randint(k2, (B2, N2), 0, C2, dtype=jnp.int32)
    out2 = jax.block_until_ready(
        focal_label_loss(pred2, tgt2, focal_alpha=0.1, focal_gamma=2.0,
                         reduction="mean"))
    ref2 = _focal_label_loss_ref(pred2, tgt2, focal_alpha=0.1,
                                 focal_gamma=2.0)
    assert jnp.allclose(out2, ref2, rtol=1e-5, atol=1e-5), (out2, ref2)

    print("KERNEL_OK")
</pallas_src>

<mosaic_0001>
module attributes {stable_mosaic.version = 11 : i64} {
  func.func @_focal_label_loss_kernel(%arg0: i32, %arg1: memref<8x128xf32, #tpu.memory_space<vmem>>, %arg2: memref<1x128xi32, #tpu.memory_space<vmem>>, %arg3: memref<1x128xf32, #tpu.memory_space<vmem>>) attributes {dimension_semantics = [#tpu.dimension_semantics<parallel>], iteration_bounds = array<i64: 1>, scalar_prefetch = 0 : i64, scratch_operands = 0 : i64, tpu.core_type = #tpu.core_type<tc>, window_params = [{transform_indices = @transform_0, window_bounds = array<i64: 8, 128>}, {transform_indices = @transform_1, window_bounds = array<i64: 1, 128>}, {transform_indices = @transform_2, window_bounds = array<i64: 1, 128>}]} {
    %c0 = arith.constant 0 : index
    %c0_0 = arith.constant 0 : index
    %0 = vector.load %arg1[%c0, %c0_0] : memref<8x128xf32, #tpu.memory_space<vmem>>, vector<8x128xf32>
    %c0_1 = arith.constant 0 : index
    %c0_2 = arith.constant 0 : index
    %1 = vector.load %arg2[%c0_1, %c0_2] : memref<1x128xi32, #tpu.memory_space<vmem>>, vector<1x128xi32>
    %cst = arith.constant dense<0xFF800000> : vector<128xf32>
    %2 = vector.multi_reduction <maximumf>, %0, %cst [0] : vector<8x128xf32> to vector<128xf32>
    %3 = vector.shape_cast %2 : vector<128xf32> to vector<1x128xf32>
    %4 = vector.broadcast %3 : vector<1x128xf32> to vector<8x128xf32>
    %5 = arith.subf %0, %4 : vector<8x128xf32>
    %6 = math.exp %5 : vector<8x128xf32>
    %cst_3 = arith.constant dense<0.000000e+00> : vector<128xf32>
    %7 = vector.multi_reduction <add>, %6, %cst_3 [0] : vector<8x128xf32> to vector<128xf32>
    %8 = vector.shape_cast %7 : vector<128xf32> to vector<1x128xf32>
    %9 = tpu.reciprocal %8 : vector<1x128xf32> -> vector<1x128xf32>
    %10 = vector.broadcast %9 : vector<1x128xf32> to vector<8x128xf32>
    %11 = arith.mulf %6, %10 : vector<8x128xf32>
    %12 = tpu.iota {dimensions = array<i32: 0>} : vector<8x128xi32>
    %13 = vector.broadcast %1 : vector<1x128xi32> to vector<8x128xi32>
    %14 = arith.cmpi eq, %12, %13 : vector<8x128xi32>
    %cst_4 = arith.constant 1.000000e+00 : f32
    %15 = vector.broadcast %cst_4 : f32 to vector<8x128xf32>
    %16 = arith.subf %15, %11 : vector<8x128xf32>
    %17 = arith.select %14, %11, %16 : vector<8x128xi1>, vector<8x128xf32>
    %cst_5 = arith.constant 1.000000e+00 : f32
    %18 = vector.broadcast %cst_5 : f32 to vector<8x128xf32>
    %19 = arith.subf %18, %17 : vector<8x128xf32>
    %20 = arith.mulf %19, %19 : vector<8x128xf32>
    %cst_6 = arith.constant -1.000000e-01 : f32
    %21 = vector.broadcast %cst_6 : f32 to vector<8x128xf32>
    %22 = arith.mulf %21, %20 : vector<8x128xf32>
    %23 = math.log %17 : vector<8x128xf32>
    %24 = arith.mulf %22, %23 : vector<8x128xf32>
    %cst_7 = arith.constant dense<0.000000e+00> : vector<128xf32>
    %25 = vector.multi_reduction <add>, %24, %cst_7 [0] : vector<8x128xf32> to vector<128xf32>
    %26 = vector.shape_cast %25 : vector<128xf32> to vector<1x128xf32>
    %c0_8 = arith.constant 0 : index
    %c0_9 = arith.constant 0 : index
    %27 = vector.load %arg3[%c0_8, %c0_9] : memref<1x128xf32, #tpu.memory_space<vmem>>, vector<1x128xf32>
    tpu.vector_store %arg3[%c0_8, %c0_9], %26 {strides = array<i32>} : memref<1x128xf32, #tpu.memory_space<vmem>>, vector<1x128xf32>,
    return
  }
  func.func @transform_0(%arg0: i32) -> (i32, i32) {
    %c0_i32 = arith.constant 0 : i32
    %c0_i32_0 = arith.constant 0 : i32
    return %c0_i32, %arg0 : i32, i32
  }
  func.func @transform_1(%arg0: i32) -> (i32, i32) {
    %c0_i32 = arith.constant 0 : i32
    %c0_i32_0 = arith.constant 0 : i32
    return %c0_i32, %arg0 : i32, i32
  }
  func.func @transform_2(%arg0: i32) -> (i32, i32) {
    %c0_i32 = arith.constant 0 : i32
    %c0_i32_0 = arith.constant 0 : i32
    return %c0_i32, %arg0 : i32, i32
  }
}

</mosaic_0001>

<llo_original>
// kernel: tpu_custom_call.1
$region0: #{tpu_custom_call.1}
  #allocation0 [shape = 'u32[]', space=smem, size = 0x4, offset = 0x4, fixed_abs, tag = 'smem constant byte address 0x4 - core index']
  #allocation1 [shape = 'u32[72,128]{1,0:T(1,128)}', space=vmem, size = 0x9000, scoped, tag = 'internal scratch']
  %s0 = inlined_call_operand.hbm [shape: f32[8,128], index: 0, kind: input, shape index: {}]
  %s1 = inlined_call_operand.hbm [shape: s32[1,128], index: 1, kind: input, shape index: {}]
  %s2 = inlined_call_operand.hbm [shape: f32[1,128], index: 2, kind: output, shape index: {}]
  %s3 = sld [smem:[#allocation0]]
  $region26: #{tpu_custom_call.1} parent=0
    _
  %s5 = ssub.s32 1, %s3
  %s6 = scalar_select 0, %s5, %s3
  $region1: #{tpu_custom_call.1} parent=0
    #allocation2 [shape = 'u8[4096]{0}', space=vmem, size = 0x1000, scoped, tag = 'input window, operand 0, single buffered']
    #allocation3 [shape = 's32[1]{0}', space=sflag, size = 0x4, scoped, tag = 'scoped memory for tpu_custom_call.1']
    #allocation4 [shape = 's32[1]{0}', space=sflag, size = 0x4, scoped, tag = 'scoped memory for tpu_custom_call.1']
    #allocation5 [shape = 'u8[512]{0}', space=vmem, size = 0x400, scoped, tag = 'input window, operand 1, single buffered']
    #allocation6 [shape = 's32[1]{0}', space=sflag, size = 0x4, scoped, tag = 'scoped memory for tpu_custom_call.1']
    #allocation7 [shape = 'u8[512]{0}', space=vmem, size = 0x400, scoped, tag = 'output window, operand 0, single buffered']
    %7 = vsyncpa [#allocation3], 0
    %8 = vsyncpa [#allocation6], 0
    %9 = vsyncpa [#allocation4], 0
    // Predicated region
    $region2: #{tpu_custom_call.1} parent=1 // pred_check
      _
    $region3: #{tpu_custom_call.1} parent=1 // pred_check_branch
      %11 = sbr.rel (0) target = $region5
    $region4: #{tpu_custom_call.1} parent=1 // pred_region
      %13 = vsyncadd [#allocation3], 0
      %s15 = sshll.u32 %s0, 4
      %s16 = int_to_ptr.hbm [resolvable:$true] %s15
      %s17 = sshll.u32 [#allocation2], 4
      %s18 = int_to_ptr.vmem [resolvable:$true] %s17
      %20 = dma.hbm_to_vmem [thread:$0]  %s16, 128, %s18, [#allocation3]
    $region5: #{tpu_custom_call.1} parent=1 // pred_fallthru
      _
    // Predicated region
    $region6: #{tpu_custom_call.1} parent=1 // pred_check
      _
    $region7: #{tpu_custom_call.1} parent=1 // pred_check_branch
      %22 = sbr.rel (0) target = $region9
    $region8: #{tpu_custom_call.1} parent=1 // pred_region
      %24 = vsyncadd [#allocation6], 0
      %s26 = sshll.u32 %s1, 4
      %s27 = int_to_ptr.hbm [resolvable:$true] %s26
      %s28 = sshll.u32 [#allocation5], 4
      %s29 = int_to_ptr.vmem [resolvable:$true] %s28
      %31 = dma.hbm_to_vmem [thread:$0]  %s27, 16, %s29, [#allocation6]
    $region9: #{tpu_custom_call.1} parent=1 // pred_fallthru
      _
    // Predicated region
    $region10: #{tpu_custom_call.1} parent=1 // pred_check
      _
    $region11: #{tpu_custom_call.1} parent=1 // pred_check_branch
      %33 = sbr.rel (0) target = $region13
    $region12: #{tpu_custom_call.1} parent=1 // pred_region
      %35 = dma.done [#allocation3], 128
    $region13: #{tpu_custom_call.1} parent=1 // pred_fallthru
      _
    // Predicated region
    $region14: #{tpu_custom_call.1} parent=1 // pred_check
      _
    $region15: #{tpu_custom_call.1} parent=1 // pred_check_branch
      %37 = sbr.rel (0) target = $region17
    $region16: #{tpu_custom_call.1} parent=1 // pred_region
      %39 = dma.done [#allocation6], 16
    $region17: #{tpu_custom_call.1} parent=1 // pred_fallthru
      _
    %v40 = vld [vmem:[#allocation2] sm:$0xff]
    %v41 = vld [vmem:[#allocation5] sm:$0x1]
    %v42 = vrot.slane %v40, 4
    %v43 = vmax.f32 %v40, %v42
    %v44 = vrot.slane %v43, 2
    %v45 = vmax.f32 %v43, %v44
    %v46 = vrot.slane %v45, 1
    %v47 = vmax.f32 %v45, %v46
    %v48 = vsub.f32 %v40, %v47
    %v49 = vmul.f32 %v48, 1.442695
    %v50 = vpow.pop %v49
    %v51 = vrot.slane %v50, 4
    %v52 = vadd.f32 %v50, %v51
    %v53 = vrot.slane %v52, 2
    %v54 = vadd.f32 %v52, %v53
    %v55 = vrot.slane %v54, 1
    %v56 = vadd.f32 %v54, %v55
    %v57 = vrcp.pop %v56
    %v58 = vmul.f32 %v56, %v57
    %v59 = vsub.f32 1.0, %v58
    %v60 = vmul.f32 %v57, %v59
    %v61 = vadd.f32 %v57, %v60
    %vm62 = vweird.f32 %v56
    %vm63 = vweird.f32 %v57
    %vm64 = vmor %vm62, %vm63
    %v65 = vsel %vm64, %v57, %v61
    %v66 = vand.u32 2147483647, %v56
    %vm67 = vcmp.eq.f32.partialorder %v66, 8.507059e+37
    %v68 = vand.u32 %v56, 2147483648
    %v69 = vor.u32 1.1754944e-38, %v68
    %v70 = vsel %vm67, %v69, %v65
    %v71 = vmul.f32 %v50, %v70
    %v72 = vlaneseq
    %v73 = vshrl.u32 %v72, 7
    %v74 = vperm.slane %v41, 0
    %vm75 = vcmp.eq.s32.totalorder %v73, %v74
    %v76 = vsub.f32 1.0, %v71
    %v77 = vsel %vm75, %v71, %v76
    %v78 = vsub.f32 1.0, %v77
    %v79 = vmul.f32 %v78, %v78
    %v80 = vmul.f32 %v79, -0.1
    %v81 = vlog2.pop %v77
    %v82 = vmul.f32 %v81, 0.6931472
    %v83 = vmul.f32 %v80, %v82
    %v84 = vrot.slane %v83, 4
    %v85 = vadd.f32 %v83, %v84
    %v86 = vrot.slane %v85, 2
    %v87 = vadd.f32 %v85, %v86
    %v88 = vrot.slane %v87, 1
    %v89 = vadd.f32 %v87, %v88
    %90 = vst [vmem:[#allocation7] sm:$0x1] %v89
    // Predicated region
    $region18: #{tpu_custom_call.1} parent=1 // pred_check
      _
    $region19: #{tpu_custom_call.1} parent=1 // pred_check_branch
      %92 = sbr.rel (0) target = $region21
    $region20: #{tpu_custom_call.1} parent=1 // pred_region
      %94 = vsyncadd [#allocation4], 0
      %s96 = sshll.u32 [#allocation7], 4
      %s97 = int_to_ptr.vmem [resolvable:$true] %s96
      %s98 = sshll.u32 %s2, 4
      %s99 = int_to_ptr.hbm [resolvable:$true] %s98
      %101 = dma.vmem_to_hbm [thread:$0]  %s97, 16, %s99, [#allocation4]
    $region21: #{tpu_custom_call.1} parent=1 // pred_fallthru
      _
    // Predicated region
    $region22: #{tpu_custom_call.1} parent=1 // pred_check
      _
    $region23: #{tpu_custom_call.1} parent=1 // pred_check_branch
      %103 = sbr.rel (0) target = $region25
    $region24: #{tpu_custom_call.1} parent=1 // pred_region
      %105 = dma.done [#allocation4], 16
    $region25: #{tpu_custom_call.1} parent=1 // pred_fallthru
      _
    %106 = vsyncpa [#allocation3], 1
    %107 = vsyncpa [#allocation6], 1
    %108 = vsyncpa [#allocation4], 1

</llo_original>
